<compile_context>
chip_gen: v7x
topology: tpu7x:2x2x1
jax: 0.10.0
libtpu: 0.0.40
codegen_flags: <defaults>
</compile_context>

<pallas_src>
import functools

import jax
import jax.numpy as jnp
from jax.experimental import pallas as pl
from jax.experimental.pallas import tpu as pltpu

SIGMA = 0.3
EMBEDDING_SIZE = 10  # M


def _round_up(n, m):
    return ((n + m - 1) // m) * m


def _duq_kernel(x_ref, w1_ref, w2_ref, b12_ref, w3z_ref, bz_ref,
                z_ref, y_ref, *, mn, n_emb, inv_scale):
    # --- 2-layer ReLU MLP (fc3 is folded into w3z / bz by the wrapper) ---
    x = x_ref[...]
    h = jnp.dot(x, w1_ref[...], preferred_element_type=jnp.float32) + b12_ref[0:1, :]
    h = jnp.maximum(h, 0.0)
    h = jnp.dot(h, w2_ref[...], preferred_element_type=jnp.float32) + b12_ref[1:2, :]
    h = jnp.maximum(h, 0.0)

    # t = h2 @ (w3 @ wmn_T)  : fc3 + einsum('ij,mnj->imn') fused into one matmul.
    t = jnp.dot(h, w3z_ref[...], preferred_element_type=jnp.float32)   # (TB, MN_pad)

    # z = fc3(h2) @ wmn_T = t + b3 @ wmn_T        (row 0 of bz)
    z_ref[...] = t + bz_ref[0:1, :]

    # diff = z - emb = t + (b3 @ wmn_T - emb)     (row 1 of bz)
    diff = t + bz_ref[1:2, :]
    sq = diff * diff

    # Reduce over M via one tiny MXU matmul against a scaled block-diagonal
    # selector built from iota (replaces the serial lane-slice loop).
    mn_pad = z_ref.shape[1]
    n_pad = y_ref.shape[1]
    rows = jax.lax.broadcasted_iota(jnp.int32, (mn_pad, n_pad), 0)
    cols = jax.lax.broadcasted_iota(jnp.int32, (mn_pad, n_pad), 1)
    sel = jnp.where((rows % n_emb == cols) & (rows < mn),
                    jnp.float32(-inv_scale), jnp.float32(0.0))
    acc = jnp.dot(sq, sel, preferred_element_type=jnp.float32)          # (TB, n_pad)
    y_ref[...] = jnp.exp(acc)


def model_bilinear_forward(x, params, *, tb_max=512):
    """Returns (z, y_pred) matching ModelBilinear.forward semantics."""
    w1, b1, w2, b2, w3, b3, W, m_buf, N_buf = params
    B = x.shape[0]
    M, n_emb, F = W.shape
    MN = M * n_emb
    MN_pad = _round_up(MN, 128)   # lane-dense z block
    N_pad = _round_up(n_emb, 128)  # lane-dense y block

    hi = jax.lax.Precision.HIGHEST
    # Pre-transpose / flatten W on the host and fold fc3 into it.
    wmn_T = jnp.transpose(W.reshape(MN, F))                 # (F, MN)
    w3z = jnp.dot(w3, wmn_T, precision=hi)                  # (F, MN)
    b3z = jnp.dot(b3, wmn_T, precision=hi)                  # (1, MN)
    emb = (m_buf / N_buf[None, :]).reshape(1, MN)           # (1, MN)

    pad_c = MN_pad - MN
    w3z_p = jnp.pad(w3z, ((0, 0), (0, pad_c)))              # (F, MN_pad)
    b3z_p = jnp.pad(b3z, ((0, 0), (0, pad_c)))              # (1, MN_pad)
    emb_p = jnp.pad(emb, ((0, 0), (0, pad_c)))              # (1, MN_pad)
    bz = jnp.concatenate([b3z_p, b3z_p - emb_p], axis=0)    # (2, MN_pad)
    b12 = jnp.concatenate([b1, b2], axis=0)                 # (2, F)

    # Batch tiling (grid over B; trivial single step for tiny demo batches).
    TB = min(tb_max, _round_up(B, 8))
    Bp = _round_up(B, TB)
    xp = jnp.pad(x, ((0, Bp - B), (0, 0)))

    kernel = functools.partial(
        _duq_kernel, mn=MN, n_emb=n_emb,
        inv_scale=1.0 / (float(M) * 2.0 * SIGMA * SIGMA))

    z_pad, y_pad = pl.pallas_call(
        kernel,
        grid=(Bp // TB,),
        in_specs=[
            pl.BlockSpec((TB, 2), lambda i: (i, 0)),
            pl.BlockSpec((2, F), lambda i: (0, 0)),
            pl.BlockSpec((F, F), lambda i: (0, 0)),
            pl.BlockSpec((2, F), lambda i: (0, 0)),
            pl.BlockSpec((F, MN_pad), lambda i: (0, 0)),
            pl.BlockSpec((2, MN_pad), lambda i: (0, 0)),
        ],
        out_specs=(
            pl.BlockSpec((TB, MN_pad), lambda i: (i, 0)),
            pl.BlockSpec((TB, N_pad), lambda i: (i, 0)),
        ),
        out_shape=(
            jax.ShapeDtypeStruct((Bp, MN_pad), jnp.float32),
            jax.ShapeDtypeStruct((Bp, N_pad), jnp.float32),
        ),
        compiler_params=pltpu.CompilerParams(
            dimension_semantics=("parallel",)),
    )(xp, w1, w2, b12, w3z_p, bz)

    z = z_pad[:B, :MN].reshape(B, M, n_emb)
    y_pred = y_pad[:B, :n_emb]
    return z, y_pred


def init_params(key, features, num_embeddings):
    """Deterministic synthetic parameters with the shapes ModelBilinear.__init__ implies."""
    ks = jax.random.split(key, 8)
    # Linear weights stored pre-transposed as (in, out); biases as (1, out).
    w1 = jax.random.normal(ks[0], (2, features), jnp.float32) * 0.5
    b1 = jax.random.normal(ks[1], (1, features), jnp.float32) * 0.1
    w2 = jax.random.normal(ks[2], (features, features), jnp.float32) * (1.0 / jnp.sqrt(features))
    b2 = jax.random.normal(ks[3], (1, features), jnp.float32) * 0.1
    w3 = jax.random.normal(ks[4], (features, features), jnp.float32) * (1.0 / jnp.sqrt(features))
    b3 = jax.random.normal(ks[5], (1, features), jnp.float32) * 0.1
    W = jax.random.normal(ks[6], (EMBEDDING_SIZE, num_embeddings, features), jnp.float32)
    N_buf = jnp.ones((num_embeddings,), jnp.float32) * 20.0
    m_buf = jax.random.normal(ks[7], (EMBEDDING_SIZE, num_embeddings), jnp.float32) * N_buf[None, :]
    return (w1, b1, w2, b2, w3, b3, W, m_buf, N_buf)


def _reference_forward(x, params):
    """Pure-JAX reference mirroring the PyTorch module, for a correctness check."""
    w1, b1, w2, b2, w3, b3, W, m_buf, N_buf = params
    h = jax.nn.relu(x @ w1 + b1)
    h = jax.nn.relu(h @ w2 + b2)
    h = h @ w3 + b3
    z = jnp.einsum('ij,mnj->imn', h, W)
    emb = m_buf / N_buf[None, :]
    diff = z - emb[None, :, :]
    y = jnp.exp(jnp.mean(-diff ** 2, axis=1) / (2.0 * SIGMA ** 2))
    return z, y


if __name__ == "__main__":
    key = jax.random.PRNGKey(0)
    k_param, k_x = jax.random.split(key)

    features = 32
    num_embeddings = 4
    batch = 8

    params = init_params(k_param, features, num_embeddings)
    x = jax.random.normal(k_x, (batch, 2), jnp.float32)

    z, y_pred = model_bilinear_forward(x, params)
    jax.block_until_ready((z, y_pred))

    z_ref, y_ref = _reference_forward(x, params)
    assert z.shape == (batch, EMBEDDING_SIZE, num_embeddings)
    assert y_pred.shape == (batch, num_embeddings)
    assert jnp.allclose(z, z_ref, atol=1e-3, rtol=1e-3)
    assert jnp.allclose(y_pred, y_ref, atol=1e-3, rtol=1e-3)

    print("KERNEL_OK")
</pallas_src>

<mosaic_0001>
module attributes {stable_mosaic.version = 11 : i64} {
  func.func @_duq_kernel(%arg0: i32, %arg1: memref<8x2xf32, #tpu.memory_space<vmem>>, %arg2: memref<2x32xf32, #tpu.memory_space<vmem>>, %arg3: memref<32x32xf32, #tpu.memory_space<vmem>>, %arg4: memref<2x32xf32, #tpu.memory_space<vmem>>, %arg5: memref<32x128xf32, #tpu.memory_space<vmem>>, %arg6: memref<2x128xf32, #tpu.memory_space<vmem>>, %arg7: memref<8x128xf32, #tpu.memory_space<vmem>>, %arg8: memref<8x128xf32, #tpu.memory_space<vmem>>) attributes {dimension_semantics = [#tpu.dimension_semantics<parallel>], iteration_bounds = array<i64: 1>, scalar_prefetch = 0 : i64, scratch_operands = 0 : i64, tpu.core_type = #tpu.core_type<tc>, window_params = [{transform_indices = @transform_0, window_bounds = array<i64: 8, 2>}, {pipeline_mode = #tpu.pipeline_mode<synchronous>, transform_indices = @transform_1, window_bounds = array<i64: 2, 32>}, {pipeline_mode = #tpu.pipeline_mode<synchronous>, transform_indices = @transform_2, window_bounds = array<i64: 32, 32>}, {pipeline_mode = #tpu.pipeline_mode<synchronous>, transform_indices = @transform_3, window_bounds = array<i64: 2, 32>}, {pipeline_mode = #tpu.pipeline_mode<synchronous>, transform_indices = @transform_4, window_bounds = array<i64: 32, 128>}, {pipeline_mode = #tpu.pipeline_mode<synchronous>, transform_indices = @transform_5, window_bounds = array<i64: 2, 128>}, {transform_indices = @transform_6, window_bounds = array<i64: 8, 128>}, {transform_indices = @transform_7, window_bounds = array<i64: 8, 128>}]} {
    %c0 = arith.constant 0 : index
    %c0_0 = arith.constant 0 : index
    %0 = vector.load %arg1[%c0, %c0_0] : memref<8x2xf32, #tpu.memory_space<vmem>>, vector<8x2xf32>
    %c0_1 = arith.constant 0 : index
    %c0_2 = arith.constant 0 : index
    %1 = vector.load %arg2[%c0_1, %c0_2] : memref<2x32xf32, #tpu.memory_space<vmem>>, vector<2x32xf32>
    %cst = arith.constant dense<0.000000e+00> : vector<8x32xf32>
    %2 = tpu.matmul %0, %1, %cst {dimension_numbers = #tpu.dot_dimension_numbers<[1], [0], [0], [1], [0, 0, 1, 1], [], []>} : vector<8x2xf32>, vector<2x32xf32>, vector<8x32xf32> -> vector<8x32xf32>
    %c0_3 = arith.constant 0 : index
    %c0_4 = arith.constant 0 : index
    %3 = vector.load %arg4[%c0_3, %c0_4] : memref<2x32xf32, #tpu.memory_space<vmem>>, vector<1x32xf32>
    %4 = vector.broadcast %3 : vector<1x32xf32> to vector<8x32xf32>
    %5 = arith.addf %2, %4 : vector<8x32xf32>
    %cst_5 = arith.constant 0.000000e+00 : f32
    %6 = vector.broadcast %cst_5 : f32 to vector<8x32xf32>
    %7 = arith.maximumf %5, %6 : vector<8x32xf32>
    %c0_6 = arith.constant 0 : index
    %c0_7 = arith.constant 0 : index
    %8 = vector.load %arg3[%c0_6, %c0_7] : memref<32x32xf32, #tpu.memory_space<vmem>>, vector<32x32xf32>
    %cst_8 = arith.constant dense<0.000000e+00> : vector<8x32xf32>
    %9 = tpu.matmul %7, %8, %cst_8 {dimension_numbers = #tpu.dot_dimension_numbers<[1], [0], [0], [1], [0, 0, 1, 1], [], []>} : vector<8x32xf32>, vector<32x32xf32>, vector<8x32xf32> -> vector<8x32xf32>
    %c1 = arith.constant 1 : index
    %c0_9 = arith.constant 0 : index
    %10 = vector.load %arg4[%c1, %c0_9] : memref<2x32xf32, #tpu.memory_space<vmem>>, vector<1x32xf32>
    %11 = vector.broadcast %10 : vector<1x32xf32> to vector<8x32xf32>
    %12 = arith.addf %9, %11 : vector<8x32xf32>
    %cst_10 = arith.constant 0.000000e+00 : f32
    %13 = vector.broadcast %cst_10 : f32 to vector<8x32xf32>
    %14 = arith.maximumf %12, %13 : vector<8x32xf32>
    %c0_11 = arith.constant 0 : index
    %c0_12 = arith.constant 0 : index
    %15 = vector.load %arg5[%c0_11, %c0_12] : memref<32x128xf32, #tpu.memory_space<vmem>>, vector<32x128xf32>
    %cst_13 = arith.constant dense<0.000000e+00> : vector<8x128xf32>
    %16 = tpu.matmul %14, %15, %cst_13 {dimension_numbers = #tpu.dot_dimension_numbers<[1], [0], [0], [1], [0, 0, 1, 1], [], []>} : vector<8x32xf32>, vector<32x128xf32>, vector<8x128xf32> -> vector<8x128xf32>
    %c0_14 = arith.constant 0 : index
    %c0_15 = arith.constant 0 : index
    %17 = vector.load %arg6[%c0_14, %c0_15] : memref<2x128xf32, #tpu.memory_space<vmem>>, vector<1x128xf32>
    %18 = vector.broadcast %17 : vector<1x128xf32> to vector<8x128xf32>
    %19 = arith.addf %16, %18 : vector<8x128xf32>
    %c0_16 = arith.constant 0 : index
    %c0_17 = arith.constant 0 : index
    %20 = vector.load %arg7[%c0_16, %c0_17] : memref<8x128xf32, #tpu.memory_space<vmem>>, vector<8x128xf32>
    tpu.vector_store %arg7[%c0_16, %c0_17], %19 {strides = array<i32>} : memref<8x128xf32, #tpu.memory_space<vmem>>, vector<8x128xf32>,
    %c1_18 = arith.constant 1 : index
    %c0_19 = arith.constant 0 : index
    %21 = vector.load %arg6[%c1_18, %c0_19] : memref<2x128xf32, #tpu.memory_space<vmem>>, vector<1x128xf32>
    %22 = vector.broadcast %21 : vector<1x128xf32> to vector<8x128xf32>
    %23 = arith.addf %16, %22 : vector<8x128xf32>
    %24 = arith.mulf %23, %23 : vector<8x128xf32>
    %25 = tpu.iota {dimensions = array<i32: 0>} : vector<128x128xi32>
    %26 = tpu.iota {dimensions = array<i32: 1>} : vector<128x128xi32>
    %c4_i32 = arith.constant 4 : i32
    %c0_i32 = arith.constant 0 : i32
    %27 = arith.cmpi eq, %c4_i32, %c0_i32 : i32
    %c1_i32 = arith.constant 1 : i32
    %28 = arith.select %27, %c1_i32, %c4_i32 : i32
    %29 = vector.broadcast %28 : i32 to vector<128x128xi32>
    %30 = arith.remsi %25, %29 : vector<128x128xi32>
    %c0_i32_20 = arith.constant 0 : i32
    %31 = vector.broadcast %c0_i32_20 : i32 to vector<128x128xi32>
    %32 = arith.cmpi ne, %30, %31 : vector<128x128xi32>
    %c0_i32_21 = arith.constant 0 : i32
    %33 = vector.broadcast %c0_i32_21 : i32 to vector<128x128xi32>
    %34 = arith.cmpi slt, %30, %33 : vector<128x128xi32>
    %c0_i32_22 = arith.constant 0 : i32
    %35 = arith.cmpi slt, %28, %c0_i32_22 : i32
    %36 = vector.broadcast %35 : i1 to vector<128x128xi1>
    %37 = vector.broadcast %36 : vector<128x128xi1> to vector<128x128xi1>
    %38 = arith.xori %34, %37 : vector<128x128xi1>
    %39 = arith.andi %38, %32 : vector<128x128xi1>
    %40 = vector.broadcast %28 : i32 to vector<128x128xi32>
    %41 = arith.addi %30, %40 : vector<128x128xi32>
    %42 = arith.select %39, %41, %30 : vector<128x128xi1>, vector<128x128xi32>
    %43 = arith.cmpi eq, %42, %26 : vector<128x128xi32>
    %c40_i32 = arith.constant 40 : i32
    %44 = vector.broadcast %c40_i32 : i32 to vector<128x128xi32>
    %45 = arith.cmpi slt, %25, %44 : vector<128x128xi32>
    %46 = arith.andi %43, %45 : vector<128x128xi1>
    %cst_23 = arith.constant -0.555555582 : f32
    %cst_24 = arith.constant 0.000000e+00 : f32
    %47 = vector.broadcast %cst_23 : f32 to vector<128x128xf32>
    %48 = vector.broadcast %cst_24 : f32 to vector<128x128xf32>
    %49 = arith.select %46, %47, %48 : vector<128x128xi1>, vector<128x128xf32>
    %cst_25 = arith.constant dense<0.000000e+00> : vector<8x128xf32>
    %50 = tpu.matmul %24, %49, %cst_25 {dimension_numbers = #tpu.dot_dimension_numbers<[1], [0], [0], [1], [0, 0, 1, 1], [], []>} : vector<8x128xf32>, vector<128x128xf32>, vector<8x128xf32> -> vector<8x128xf32>
    %51 = math.exp %50 : vector<8x128xf32>
    %c0_26 = arith.constant 0 : index
    %c0_27 = arith.constant 0 : index
    %52 = vector.load %arg8[%c0_26, %c0_27] : memref<8x128xf32, #tpu.memory_space<vmem>>, vector<8x128xf32>
    tpu.vector_store %arg8[%c0_26, %c0_27], %51 {strides = array<i32>} : memref<8x128xf32, #tpu.memory_space<vmem>>, vector<8x128xf32>,
    return
  }
  func.func @transform_0(%arg0: i32) -> (i32, i32) {
    %c0_i32 = arith.constant 0 : i32
    %c0_i32_0 = arith.constant 0 : i32
    return %arg0, %c0_i32 : i32, i32
  }
  func.func @transform_1(%arg0: i32) -> (i32, i32) {
    %c0_i32 = arith.constant 0 : i32
    %c0_i32_0 = arith.constant 0 : i32
    %c0_i32_1 = arith.constant 0 : i32
    return %c0_i32, %c0_i32_0 : i32, i32
  }
  func.func @transform_2(%arg0: i32) -> (i32, i32) {
    %c0_i32 = arith.constant 0 : i32
    %c0_i32_0 = arith.constant 0 : i32
    %c0_i32_1 = arith.constant 0 : i32
    return %c0_i32, %c0_i32_0 : i32, i32
  }
  func.func @transform_3(%arg0: i32) -> (i32, i32) {
    %c0_i32 = arith.constant 0 : i32
    %c0_i32_0 = arith.constant 0 : i32
    %c0_i32_1 = arith.constant 0 : i32
    return %c0_i32, %c0_i32_0 : i32, i32
  }
  func.func @transform_4(%arg0: i32) -> (i32, i32) {
    %c0_i32 = arith.constant 0 : i32
    %c0_i32_0 = arith.constant 0 : i32
    %c0_i32_1 = arith.constant 0 : i32
    return %c0_i32, %c0_i32_0 : i32, i32
  }
  func.func @transform_5(%arg0: i32) -> (i32, i32) {
    %c0_i32 = arith.constant 0 : i32
    %c0_i32_0 = arith.constant 0 : i32
    %c0_i32_1 = arith.constant 0 : i32
    return %c0_i32, %c0_i32_0 : i32, i32
  }
  func.func @transform_6(%arg0: i32) -> (i32, i32) {
    %c0_i32 = arith.constant 0 : i32
    %c0_i32_0 = arith.constant 0 : i32
    return %arg0, %c0_i32 : i32, i32
  }
  func.func @transform_7(%arg0: i32) -> (i32, i32) {
    %c0_i32 = arith.constant 0 : i32
    %c0_i32_0 = arith.constant 0 : i32
    return %arg0, %c0_i32 : i32, i32
  }
}

</mosaic_0001>

<llo_original>
// kernel: tpu_custom_call.1
$region0: #{tpu_custom_call.1}
  #allocation0 [shape = 'u32[]', space=smem, size = 0x4, offset = 0x4, fixed_abs, tag = 'smem constant byte address 0x4 - core index']
  #allocation1 [shape = 'u32[144,128]{1,0:T(1,128)}', space=vmem, size = 0x12000, scoped, tag = 'internal scratch']
  %s0 = inlined_call_operand.vmem [shape: f32[8,2], index: 0, kind: input, shape index: {}]
  %s1 = inlined_call_operand.vmem [shape: f32[2,32], index: 1, kind: input, shape index: {}]
  %s2 = inlined_call_operand.hbm [shape: f32[32,32], index: 2, kind: input, shape index: {}]
  %s3 = inlined_call_operand.vmem [shape: f32[2,32], index: 3, kind: input, shape index: {}]
  %s4 = inlined_call_operand.hbm [shape: f32[32,128], index: 4, kind: input, shape index: {}]
  %s5 = inlined_call_operand.vmem [shape: f32[2,128], index: 5, kind: input, shape index: {}]
  %s6 = inlined_call_operand.hbm [shape: f32[8,128], index: 6, kind: output, shape index: {0}]
  %s7 = inlined_call_operand.hbm [shape: f32[8,128], index: 7, kind: output, shape index: {1}]
  %8 = xla_tuple %s6, %s7
  %s9 = sld [smem:[#allocation0]]
  $region50: #{tpu_custom_call.1} parent=0
    _
  %s11 = ssub.s32 1, %s9
  %s12 = scalar_select 0, %s11, %s9
  $region1: #{tpu_custom_call.1} parent=0
    #allocation2 [shape = 'u8[16384]{0}', space=vmem, size = 0x4000, scoped, tag = 'input window, operand 2, single buffered']
    #allocation3 [shape = 's32[1]{0}', space=sflag, size = 0x4, scoped, tag = 'scoped memory for tpu_custom_call.1']
    #allocation4 [shape = 's32[1]{0}', space=sflag, size = 0x4, scoped, tag = 'scoped memory for tpu_custom_call.1']
    #allocation5 [shape = 'u8[16384]{0}', space=vmem, size = 0x4000, scoped, tag = 'input window, operand 4, single buffered']
    #allocation6 [shape = 's32[1]{0}', space=sflag, size = 0x4, scoped, tag = 'scoped memory for tpu_custom_call.1']
    #allocation7 [shape = 'u8[4096]{0}', space=vmem, size = 0x1000, scoped, tag = 'output window, operand 0, single buffered']
    #allocation8 [shape = 'u8[4096]{0}', space=vmem, size = 0x1000, scoped, tag = 'output window, operand 1, single buffered']
    #allocation9 [shape = 's32[1]{0}', space=sflag, size = 0x4, scoped, tag = 'scoped memory for tpu_custom_call.1']
    %13 = vsyncpa [#allocation3], 0
    %14 = vsyncpa [#allocation6], 0
    %15 = vsyncpa [#allocation4], 0
    %16 = vsyncpa [#allocation9], 0
    // Predicated region
    $region2: #{tpu_custom_call.1} parent=1 // pred_check
      _
    $region3: #{tpu_custom_call.1} parent=1 // pred_check_branch
      %18 = sbr.rel (0) target = $region5
    $region4: #{tpu_custom_call.1} parent=1 // pred_region
      _
    $region5: #{tpu_custom_call.1} parent=1 // pred_fallthru
      _
    // Predicated region
    $region6: #{tpu_custom_call.1} parent=1 // pred_check
      _
    $region7: #{tpu_custom_call.1} parent=1 // pred_check_branch
      %20 = sbr.rel (0) target = $region9
    $region8: #{tpu_custom_call.1} parent=1 // pred_region
      _
    $region9: #{tpu_custom_call.1} parent=1 // pred_fallthru
      _
    // Predicated region
    $region10: #{tpu_custom_call.1} parent=1 // pred_check
      _
    $region11: #{tpu_custom_call.1} parent=1 // pred_check_branch
      %22 = sbr.rel (0) target = $region13
    $region12: #{tpu_custom_call.1} parent=1 // pred_region
      %s24 = ssub.s32 512, 512
      %25 = vsyncadd [#allocation3], %s24
      %s26 = sshll.u32 [#allocation2], 4
      %s27 = int_to_ptr.vmem [resolvable:$true] %s26
      %32 = dma.hbm_to_vmem [thread:$0]  %s2, 512, %s27, [#allocation3], 128, 128, 8
    $region13: #{tpu_custom_call.1} parent=1 // pred_fallthru
      _
    // Predicated region
    $region14: #{tpu_custom_call.1} parent=1 // pred_check
      _
    $region15: #{tpu_custom_call.1} parent=1 // pred_check_branch
      %34 = sbr.rel (0) target = $region17
    $region16: #{tpu_custom_call.1} parent=1 // pred_region
      _
    $region17: #{tpu_custom_call.1} parent=1 // pred_fallthru
      _
    // Predicated region
    $region18: #{tpu_custom_call.1} parent=1 // pred_check
      _
    $region19: #{tpu_custom_call.1} parent=1 // pred_check_branch
      %36 = sbr.rel (0) target = $region21
    $region20: #{tpu_custom_call.1} parent=1 // pred_region
      %s38 = ssub.s32 512, 512
      %39 = vsyncadd [#allocation6], %s38
      %s40 = sshll.u32 [#allocation5], 4
      %s41 = int_to_ptr.vmem [resolvable:$true] %s40
      %46 = dma.hbm_to_vmem [thread:$0]  %s4, 512, %s41, [#allocation6], 128, 128, 8
    $region21: #{tpu_custom_call.1} parent=1 // pred_fallthru
      _
    // Predicated region
    $region22: #{tpu_custom_call.1} parent=1 // pred_check
      _
    $region23: #{tpu_custom_call.1} parent=1 // pred_check_branch
      %48 = sbr.rel (0) target = $region25
    $region24: #{tpu_custom_call.1} parent=1 // pred_region
      _
    $region25: #{tpu_custom_call.1} parent=1 // pred_fallthru
      _
    // Predicated region
    $region26: #{tpu_custom_call.1} parent=1 // pred_check
      _
    $region27: #{tpu_custom_call.1} parent=1 // pred_check_branch
      %50 = sbr.rel (0) target = $region29
    $region28: #{tpu_custom_call.1} parent=1 // pred_region
      %51 = dma.done [#allocation3], 512
    $region29: #{tpu_custom_call.1} parent=1 // pred_fallthru
      _
    // Predicated region
    $region30: #{tpu_custom_call.1} parent=1 // pred_check
      _
    $region31: #{tpu_custom_call.1} parent=1 // pred_check_branch
      %53 = sbr.rel (0) target = $region33
    $region32: #{tpu_custom_call.1} parent=1 // pred_region
      %54 = dma.done [#allocation6], 512
    $region33: #{tpu_custom_call.1} parent=1 // pred_fallthru
      _
    %v55 = vld [vmem:[%s0] sm:$0xff]
    %v56 = vld [vmem:[%s1] sm:$0x3]
    %v57 = vld [vmem:[%s3] sm:$0x1]
    %v58 = vlaneseq
    %v59 = vshrl.u32 %v58, 7
    %v60 = vsub.s32 0, %v59
    %v61 = vrot.slane %v57, %v60
    %vm62 = vcmask 15360
    %v64 = vsel %vm62, %v55, 0
    %vm66 = vcmask 1041408
    %v68 = vsel %vm66, %v56, 0
    %70 = vmatprep.subr.mxu0 0.0
    %71 = vmatpush1.msra.mxu0 %v68
    %72 = vmatprep.subr.mxu0 0.0
    %73 = vmatpush1.msra.mxu0 0.0
    %74 = vmatprep.subr.mxu0 0.0
    %75 = vmatpush1.msra.mxu0 0.0
    %76 = vmatprep.subr.mxu0 0.0
    %77 = vmatpush1.msra.mxu0 0.0
    %78 = vmatprep.subr.mxu0 0.0
    %79 = vmatpush1.msra.mxu0 0.0
    %80 = vmatprep.subr.mxu0 0.0
    %81 = vmatpush1.msra.mxu0 0.0
    %82 = vmatprep.subr.mxu0 0.0
    %83 = vmatpush1.msra.mxu0 0.0
    %84 = vmatprep.subr.mxu0 0.0
    %85 = vmatpush1.msra.mxu0 0.0
    %86 = vmatprep.subr.mxu0 0.0
    %87 = vmatpush1.msra.mxu0 0.0
    %88 = vmatprep.subr.mxu0 0.0
    %89 = vmatpush1.msra.mxu0 0.0
    %90 = vmatprep.subr.mxu0 0.0
    %91 = vmatpush1.msra.mxu0 0.0
    %92 = vmatprep.subr.mxu0 0.0
    %93 = vmatpush1.msra.mxu0 0.0
    %94 = vmatprep.subr.mxu0 0.0
    %95 = vmatpush1.msra.mxu0 0.0
    %96 = vmatprep.subr.mxu0 0.0
    %97 = vmatpush1.msra.mxu0 0.0
    %98 = vmatprep.subr.mxu0 0.0
    %99 = vmatpush1.msra.mxu0 0.0
    %100 = vmatprep.subr.mxu0 0.0
    %101 = vmatpush1.msra.mxu0 0.0
    %102 = vmatprep.subr.mxu0 0.0
    %103 = vmatpush1.msra.mxu0 0.0
    %104 = vmatprep.subr.mxu0 0.0
    %105 = vmatpush1.msra.mxu0 0.0
    %106 = vmatprep.subr.mxu0 0.0
    %107 = vmatpush1.msra.mxu0 0.0
    %108 = vmatprep.subr.mxu0 0.0
    %109 = vmatpush1.msra.mxu0 0.0
    %110 = vmatprep.subr.mxu0 0.0
    %111 = vmatpush1.msra.mxu0 0.0
    %112 = vmatprep.subr.mxu0 0.0
    %113 = vmatpush1.msra.mxu0 0.0
    %114 = vmatprep.subr.mxu0 0.0
    %115 = vmatpush1.msra.mxu0 0.0
    %116 = vmatprep.subr.mxu0 0.0
    %117 = vmatpush1.msra.mxu0 0.0
    %118 = vmatprep.subr.mxu0 0.0
    %119 = vmatpush1.msra.mxu0 0.0
    %120 = vmatprep.subr.mxu0 0.0
    %121 = vmatpush1.msra.mxu0 0.0
    %122 = vmatprep.subr.mxu0 0.0
    %123 = vmatpush1.msra.mxu0 0.0
    %124 = vmatprep.subr.mxu0 0.0
    %125 = vmatpush1.msra.mxu0 0.0
    %126 = vmatprep.subr.mxu0 0.0
    %127 = vmatpush1.msra.mxu0 0.0
    %128 = vmatprep.subr.mxu0 0.0
    %129 = vmatpush1.msra.mxu0 0.0
    %130 = vmatprep.subr.mxu0 0.0
    %131 = vmatpush1.msra.mxu0 0.0
    %132 = vmatprep.subr.mxu0 0.0
    %133 = vmatpush1.msra.mxu0 0.0
    %134 = vmatprep.mubr.f32.mxu0 0.0
    %135 = vmatmul.mubr.f32.gmra.mrb[0].mxu0 %v64
    %v136 = vpop.f32.mrb[0].mxu0
    %v137 = vadd.f32 %v61, %v136
    %v138 = vpop.f32.mrb[0].mxu0
    %139 = vdwg.mxu0
    %v140 = vmax.f32 %v137, 0.0
    %v141 = vld [vmem:[#allocation2] sm:$0xff]
    %v142 = vld [vmem:[#allocation2 + $0x8] sm:$0xff]
    %v143 = vld [vmem:[#allocation2 + $0x10] sm:$0xff]
    %v144 = vld [vmem:[#allocation2 + $0x18] sm:$0xff]
    %v145 = vld [vmem:[%s3 + $0x1] sm:$0x1]
    %v146 = vlaneseq
    %v147 = vshrl.u32 %v146, 7
    %v148 = vsub.s32 0, %v147
    %v149 = vrot.slane %v145, %v148
    %vm150 = vcmask 261120
    %v152 = vsel %vm150, %v140, 0
    %154 = vmatprep.subr.mxu0 0.0
    %155 = vmatpush1.msra.mxu0 %v141
    %156 = vmatprep.subr.mxu0 0.0
    %157 = vmatpush1.msra.mxu0 %v142
    %158 = vmatprep.subr.mxu0 0.0
    %159 = vmatpush1.msra.mxu0 %v143
    %160 = vmatprep.subr.mxu0 0.0
    %161 = vmatpush1.msra.mxu0 %v144
    %162 = vmatprep.subr.mxu0 0.0
    %163 = vmatpush1.msra.mxu0 0.0
    %164 = vmatprep.subr.mxu0 0.0
    %165 = vmatpush1.msra.mxu0 0.0
    %166 = vmatprep.subr.mxu0 0.0
    %167 = vmatpush1.msra.mxu0 0.0
    %168 = vmatprep.subr.mxu0 0.0
    %169 = vmatpush1.msra.mxu0 0.0
    %170 = vmatprep.subr.mxu0 0.0
    %171 = vmatpush1.msra.mxu0 0.0
    %172 = vmatprep.subr.mxu0 0.0
    %173 = vmatpush1.msra.mxu0 0.0
    %174 = vmatprep.subr.mxu0 0.0
    %175 = vmatpush1.msra.mxu0 0.0
    %176 = vmatprep.subr.mxu0 0.0
    %177 = vmatpush1.msra.mxu0 0.0
    %178 = vmatprep.subr.mxu0 0.0
    %179 = vmatpush1.msra.mxu0 0.0
    %180 = vmatprep.subr.mxu0 0.0
    %181 = vmatpush1.msra.mxu0 0.0
    %182 = vmatprep.subr.mxu0 0.0
    %183 = vmatpush1.msra.mxu0 0.0
    %184 = vmatprep.subr.mxu0 0.0
    %185 = vmatpush1.msra.mxu0 0.0
    %186 = vmatprep.subr.mxu0 0.0
    %187 = vmatpush1.msra.mxu0 0.0
    %188 = vmatprep.subr.mxu0 0.0
    %189 = vmatpush1.msra.mxu0 0.0
    %190 = vmatprep.subr.mxu0 0.0
    %191 = vmatpush1.msra.mxu0 0.0
    %192 = vmatprep.subr.mxu0 0.0
    %193 = vmatpush1.msra.mxu0 0.0
    %194 = vmatprep.subr.mxu0 0.0
    %195 = vmatpush1.msra.mxu0 0.0
    %196 = vmatprep.subr.mxu0 0.0
    %197 = vmatpush1.msra.mxu0 0.0
    %198 = vmatprep.subr.mxu0 0.0
    %199 = vmatpush1.msra.mxu0 0.0
    %200 = vmatprep.subr.mxu0 0.0
    %201 = vmatpush1.msra.mxu0 0.0
    %202 = vmatprep.subr.mxu0 0.0
    %203 = vmatpush1.msra.mxu0 0.0
    %204 = vmatprep.subr.mxu0 0.0
    %205 = vmatpush1.msra.mxu0 0.0
    %206 = vmatprep.subr.mxu0 0.0
    %207 = vmatpush1.msra.mxu0 0.0
    %208 = vmatprep.subr.mxu0 0.0
    %209 = vmatpush1.msra.mxu0 0.0
    %210 = vmatprep.subr.mxu0 0.0
    %211 = vmatpush1.msra.mxu0 0.0
    %212 = vmatprep.subr.mxu0 0.0
    %213 = vmatpush1.msra.mxu0 0.0
    %214 = vmatprep.subr.mxu0 0.0
    %215 = vmatpush1.msra.mxu0 0.0
    %216 = vmatprep.subr.mxu0 0.0
    %217 = vmatpush1.msra.mxu0 0.0
    %218 = vmatprep.mubr.f32.mxu0 0.0
    %219 = vmatmul.mubr.f32.gmra.mrb[0].mxu0 %v152
    %v220 = vpop.f32.mrb[0].mxu0
    %v221 = vadd.f32 %v149, %v220
    %v222 = vpop.f32.mrb[0].mxu0
    %223 = vdwg.mxu0
    %v224 = vmax.f32 %v221, 0.0
    %v225 = vld [vmem:[#allocation5] sm:$0xff]
    %v226 = vld [vmem:[#allocation5 + $0x8] sm:$0xff]
    %v227 = vld [vmem:[#allocation5 + $0x10] sm:$0xff]
    %v228 = vld [vmem:[#allocation5 + $0x18] sm:$0xff]
    %v230 = vsel %vm150, %v224, 0
    %232 = vmatprep.subr.mxu0 0.0
    %233 = vmatpush1.msra.mxu0 %v225
    %234 = vmatprep.subr.mxu0 0.0
    %235 = vmatpush1.msra.mxu0 %v226
    %236 = vmatprep.subr.mxu0 0.0
    %237 = vmatpush1.msra.mxu0 %v227
    %238 = vmatprep.subr.mxu0 0.0
    %239 = vmatpush1.msra.mxu0 %v228
    %240 = vmatprep.subr.mxu0 0.0
    %241 = vmatpush1.msra.mxu0 0.0
    %242 = vmatprep.subr.mxu0 0.0
    %243 = vmatpush1.msra.mxu0 0.0
    %244 = vmatprep.subr.mxu0 0.0
    %245 = vmatpush1.msra.mxu0 0.0
    %246 = vmatprep.subr.mxu0 0.0
    %247 = vmatpush1.msra.mxu0 0.0
    %248 = vmatprep.subr.mxu0 0.0
    %249 = vmatpush1.msra.mxu0 0.0
    %250 = vmatprep.subr.mxu0 0.0
    %251 = vmatpush1.msra.mxu0 0.0
    %252 = vmatprep.subr.mxu0 0.0
    %253 = vmatpush1.msra.mxu0 0.0
    %254 = vmatprep.subr.mxu0 0.0
    %255 = vmatpush1.msra.mxu0 0.0
    %256 = vmatprep.subr.mxu0 0.0
    %257 = vmatpush1.msra.mxu0 0.0
    %258 = vmatprep.subr.mxu0 0.0
    %259 = vmatpush1.msra.mxu0 0.0
    %260 = vmatprep.subr.mxu0 0.0
    %261 = vmatpush1.msra.mxu0 0.0
    %262 = vmatprep.subr.mxu0 0.0
    %263 = vmatpush1.msra.mxu0 0.0
    %264 = vmatprep.subr.mxu0 0.0
    %265 = vmatpush1.msra.mxu0 0.0
    %266 = vmatprep.subr.mxu0 0.0
    %267 = vmatpush1.msra.mxu0 0.0
    %268 = vmatprep.subr.mxu0 0.0
    %269 = vmatpush1.msra.mxu0 0.0
    %270 = vmatprep.subr.mxu0 0.0
    %271 = vmatpush1.msra.mxu0 0.0
    %272 = vmatprep.subr.mxu0 0.0
    %273 = vmatpush1.msra.mxu0 0.0
    %274 = vmatprep.subr.mxu0 0.0
    %275 = vmatpush1.msra.mxu0 0.0
    %276 = vmatprep.subr.mxu0 0.0
    %277 = vmatpush1.msra.mxu0 0.0
    %278 = vmatprep.subr.mxu0 0.0
    %279 = vmatpush1.msra.mxu0 0.0
    %280 = vmatprep.subr.mxu0 0.0
    %281 = vmatpush1.msra.mxu0 0.0
    %282 = vmatprep.subr.mxu0 0.0
    %283 = vmatpush1.msra.mxu0 0.0
    %284 = vmatprep.subr.mxu0 0.0
    %285 = vmatpush1.msra.mxu0 0.0
    %286 = vmatprep.subr.mxu0 0.0
    %287 = vmatpush1.msra.mxu0 0.0
    %288 = vmatprep.subr.mxu0 0.0
    %289 = vmatpush1.msra.mxu0 0.0
    %290 = vmatprep.subr.mxu0 0.0
    %291 = vmatpush1.msra.mxu0 0.0
    %292 = vmatprep.subr.mxu0 0.0
    %293 = vmatpush1.msra.mxu0 0.0
    %294 = vmatprep.subr.mxu0 0.0
    %295 = vmatpush1.msra.mxu0 0.0
    %296 = vmatprep.mubr.f32.mxu0 0.0
    %297 = vmatmul.mubr.f32.gmra.mrb[0].mxu0 %v230
    %v298 = vpop.f32.mrb[0].mxu0
    %v299 = vadd.f32 0.0, %v298
    %v300 = vpop.f32.mrb[0].mxu0
    %301 = vdwg.mxu0
    %v302 = vld [vmem:[%s5] sm:$0x1]
    %v303 = vlaneseq
    %v304 = vshrl.u32 %v303, 7
    %v305 = vsub.s32 0, %v304
    %v306 = vrot.slane %v302, %v305
    %v307 = vadd.f32 %v299, %v306
    %308 = vst [vmem:[#allocation7] sm:$0xff] %v307
    %v309 = vld [vmem:[%s5 + $0x1] sm:$0x1]
    %v310 = vlaneseq
    %v311 = vshrl.u32 %v310, 7
    %v312 = vsub.s32 0, %v311
    %v313 = vrot.slane %v309, %v312
    %v314 = vadd.f32 %v299, %v313
    %v315 = vmul.f32 %v314, %v314
    %v316 = vlaneseq
    %v317 = vshrl.u32 %v316, 7
    %v318 = vadd.s32 %v317, 8
    %v319 = vadd.s32 %v317, 16
    %v320 = vadd.s32 %v317, 24
    %v321 = vadd.s32 %v317, 32
    %v322 = vadd.s32 %v317, 40
    %v323 = vadd.s32 %v317, 48
    %v324 = vadd.s32 %v317, 56
    %v325 = vadd.s32 %v317, 64
    %v326 = vadd.s32 %v317, 72
    %v327 = vadd.s32 %v317, 80
    %v328 = vadd.s32 %v317, 88
    %v329 = vadd.s32 %v317, 96
    %v330 = vadd.s32 %v317, 104
    %v331 = vadd.s32 %v317, 112
    %v332 = vadd.s32 %v317, 120
    %v333 = vlaneseq
    %v334 = vand.u32 %v333, 127
    %vm335 = vcmp.lt.s32.totalorder %v317, 0
    %v336 = vsub.s32 0, %v317
    %v337 = vsel %vm335, %v336, %v317
    %v338 = vshrl.u32 %v337, 2
    %v339 = vand.u32 %v337, 3
    %v340 = vsub.s32 0, %v339
    %v341 = vsel %vm335, %v340, %v339
    %vm342 = vcmp.lt.s32.totalorder %v318, 0
    %v343 = vsub.s32 0, %v318
    %v344 = vsel %vm342, %v343, %v318
    %v345 = vshrl.u32 %v344, 2
    %v346 = vand.u32 %v344, 3
    %v347 = vsub.s32 0, %v346
    %v348 = vsel %vm342, %v347, %v346
    %vm349 = vcmp.lt.s32.totalorder %v319, 0
    %v350 = vsub.s32 0, %v319
    %v351 = vsel %vm349, %v350, %v319
    %v352 = vshrl.u32 %v351, 2
    %v353 = vand.u32 %v351, 3
    %v354 = vsub.s32 0, %v353
    %v355 = vsel %vm349, %v354, %v353
    %vm356 = vcmp.lt.s32.totalorder %v320, 0
    %v357 = vsub.s32 0, %v320
    %v358 = vsel %vm356, %v357, %v320
    %v359 = vshrl.u32 %v358, 2
    %v360 = vand.u32 %v358, 3
    %v361 = vsub.s32 0, %v360
    %v362 = vsel %vm356, %v361, %v360
    %vm363 = vcmp.lt.s32.totalorder %v321, 0
    %v364 = vsub.s32 0, %v321
    %v365 = vsel %vm363, %v364, %v321
    %v366 = vshrl.u32 %v365, 2
    %v367 = vand.u32 %v365, 3
    %v368 = vsub.s32 0, %v367
    %v369 = vsel %vm363, %v368, %v367
    %vm370 = vcmp.lt.s32.totalorder %v322, 0
    %v371 = vsub.s32 0, %v322
    %v372 = vsel %vm370, %v371, %v322
    %v373 = vshrl.u32 %v372, 2
    %v374 = vand.u32 %v372, 3
    %v375 = vsub.s32 0, %v374
    %v376 = vsel %vm370, %v375, %v374
    %vm377 = vcmp.lt.s32.totalorder %v323, 0
    %v378 = vsub.s32 0, %v323
    %v379 = vsel %vm377, %v378, %v323
    %v380 = vshrl.u32 %v379, 2
    %v381 = vand.u32 %v379, 3
    %v382 = vsub.s32 0, %v381
    %v383 = vsel %vm377, %v382, %v381
    %vm384 = vcmp.lt.s32.totalorder %v324, 0
    %v385 = vsub.s32 0, %v324
    %v386 = vsel %vm384, %v385, %v324
    %v387 = vshrl.u32 %v386, 2
    %v388 = vand.u32 %v386, 3
    %v389 = vsub.s32 0, %v388
    %v390 = vsel %vm384, %v389, %v388
    %vm391 = vcmp.lt.s32.totalorder %v325, 0
    %v392 = vsub.s32 0, %v325
    %v393 = vsel %vm391, %v392, %v325
    %v394 = vshrl.u32 %v393, 2
    %v395 = vand.u32 %v393, 3
    %v396 = vsub.s32 0, %v395
    %v397 = vsel %vm391, %v396, %v395
    %vm398 = vcmp.lt.s32.totalorder %v326, 0
    %v399 = vsub.s32 0, %v326
    %v400 = vsel %vm398, %v399, %v326
    %v401 = vshrl.u32 %v400, 2
    %v402 = vand.u32 %v400, 3
    %v403 = vsub.s32 0, %v402
    %v404 = vsel %vm398, %v403, %v402
    %vm405 = vcmp.lt.s32.totalorder %v327, 0
    %v406 = vsub.s32 0, %v327
    %v407 = vsel %vm405, %v406, %v327
    %v408 = vshrl.u32 %v407, 2
    %v409 = vand.u32 %v407, 3
    %v410 = vsub.s32 0, %v409
    %v411 = vsel %vm405, %v410, %v409
    %vm412 = vcmp.lt.s32.totalorder %v328, 0
    %v413 = vsub.s32 0, %v328
    %v414 = vsel %vm412, %v413, %v328
    %v415 = vshrl.u32 %v414, 2
    %v416 = vand.u32 %v414, 3
    %v417 = vsub.s32 0, %v416
    %v418 = vsel %vm412, %v417, %v416
    %vm419 = vcmp.lt.s32.totalorder %v329, 0
    %v420 = vsub.s32 0, %v329
    %v421 = vsel %vm419, %v420, %v329
    %v422 = vshrl.u32 %v421, 2
    %v423 = vand.u32 %v421, 3
    %v424 = vsub.s32 0, %v423
    %v425 = vsel %vm419, %v424, %v423
    %vm426 = vcmp.lt.s32.totalorder %v330, 0
    %v427 = vsub.s32 0, %v330
    %v428 = vsel %vm426, %v427, %v330
    %v429 = vshrl.u32 %v428, 2
    %v430 = vand.u32 %v428, 3
    %v431 = vsub.s32 0, %v430
    %v432 = vsel %vm426, %v431, %v430
    %vm433 = vcmp.lt.s32.totalorder %v331, 0
    %v434 = vsub.s32 0, %v331
    %v435 = vsel %vm433, %v434, %v331
    %v436 = vshrl.u32 %v435, 2
    %v437 = vand.u32 %v435, 3
    %v438 = vsub.s32 0, %v437
    %v439 = vsel %vm433, %v438, %v437
    %vm440 = vcmp.lt.s32.totalorder %v332, 0
    %v441 = vsub.s32 0, %v332
    %v442 = vsel %vm440, %v441, %v332
    %v443 = vshrl.u32 %v442, 2
    %v444 = vand.u32 %v442, 3
    %v445 = vsub.s32 0, %v444
    %v446 = vsel %vm440, %v445, %v444
    %vm447 = vcmp.ne.s32.totalorder %v341, 0
    %vm448 = vcmp.ne.s32.totalorder %v348, 0
    %vm449 = vcmp.ne.s32.totalorder %v355, 0
    %vm450 = vcmp.ne.s32.totalorder %v362, 0
    %vm451 = vcmp.ne.s32.totalorder %v369, 0
    %vm452 = vcmp.ne.s32.totalorder %v376, 0
    %vm453 = vcmp.ne.s32.totalorder %v383, 0
    %vm454 = vcmp.ne.s32.totalorder %v390, 0
    %vm455 = vcmp.ne.s32.totalorder %v397, 0
    %vm456 = vcmp.ne.s32.totalorder %v404, 0
    %vm457 = vcmp.ne.s32.totalorder %v411, 0
    %vm458 = vcmp.ne.s32.totalorder %v418, 0
    %vm459 = vcmp.ne.s32.totalorder %v425, 0
    %vm460 = vcmp.ne.s32.totalorder %v432, 0
    %vm461 = vcmp.ne.s32.totalorder %v439, 0
    %vm462 = vcmp.ne.s32.totalorder %v446, 0
    %vm463 = vcmp.lt.s32.totalorder %v341, 0
    %vm464 = vcmp.lt.s32.totalorder %v348, 0
    %vm465 = vcmp.lt.s32.totalorder %v355, 0
    %vm466 = vcmp.lt.s32.totalorder %v362, 0
    %vm467 = vcmp.lt.s32.totalorder %v369, 0
    %vm468 = vcmp.lt.s32.totalorder %v376, 0
    %vm469 = vcmp.lt.s32.totalorder %v383, 0
    %vm470 = vcmp.lt.s32.totalorder %v390, 0
    %vm471 = vcmp.lt.s32.totalorder %v397, 0
    %vm472 = vcmp.lt.s32.totalorder %v404, 0
    %vm473 = vcmp.lt.s32.totalorder %v411, 0
    %vm474 = vcmp.lt.s32.totalorder %v418, 0
    %vm475 = vcmp.lt.s32.totalorder %v425, 0
    %vm476 = vcmp.lt.s32.totalorder %v432, 0
    %vm477 = vcmp.lt.s32.totalorder %v439, 0
    %vm478 = vcmp.lt.s32.totalorder %v446, 0
    %vm479 = vmand %vm463, %vm447
    %vm480 = vmand %vm464, %vm448
    %vm481 = vmand %vm465, %vm449
    %vm482 = vmand %vm466, %vm450
    %vm483 = vmand %vm467, %vm451
    %vm484 = vmand %vm468, %vm452
    %vm485 = vmand %vm469, %vm453
    %vm486 = vmand %vm470, %vm454
    %vm487 = vmand %vm471, %vm455
    %vm488 = vmand %vm472, %vm456
    %vm489 = vmand %vm473, %vm457
    %vm490 = vmand %vm474, %vm458
    %vm491 = vmand %vm475, %vm459
    %vm492 = vmand %vm476, %vm460
    %vm493 = vmand %vm477, %vm461
    %vm494 = vmand %vm478, %vm462
    %v495 = vadd.s32 %v341, 4
    %v496 = vadd.s32 %v348, 4
    %v497 = vadd.s32 %v355, 4
    %v498 = vadd.s32 %v362, 4
    %v499 = vadd.s32 %v369, 4
    %v500 = vadd.s32 %v376, 4
    %v501 = vadd.s32 %v383, 4
    %v502 = vadd.s32 %v390, 4
    %v503 = vadd.s32 %v397, 4
    %v504 = vadd.s32 %v404, 4
    %v505 = vadd.s32 %v411, 4
    %v506 = vadd.s32 %v418, 4
    %v507 = vadd.s32 %v425, 4
    %v508 = vadd.s32 %v432, 4
    %v509 = vadd.s32 %v439, 4
    %v510 = vadd.s32 %v446, 4
    %v511 = vsel %vm479, %v495, %v341
    %v512 = vsel %vm480, %v496, %v348
    %v513 = vsel %vm481, %v497, %v355
    %v514 = vsel %vm482, %v498, %v362
    %v515 = vsel %vm483, %v499, %v369
    %v516 = vsel %vm484, %v500, %v376
    %v517 = vsel %vm485, %v501, %v383
    %v518 = vsel %vm486, %v502, %v390
    %v519 = vsel %vm487, %v503, %v397
    %v520 = vsel %vm488, %v504, %v404
    %v521 = vsel %vm489, %v505, %v411
    %v522 = vsel %vm490, %v506, %v418
    %v523 = vsel %vm491, %v507, %v425
    %v524 = vsel %vm492, %v508, %v432
    %v525 = vsel %vm493, %v509, %v439
    %v526 = vsel %vm494, %v510, %v446
    %vm527 = vcmp.eq.s32.totalorder %v511, %v334
    %vm528 = vcmp.eq.s32.totalorder %v512, %v334
    %vm529 = vcmp.eq.s32.totalorder %v513, %v334
    %vm530 = vcmp.eq.s32.totalorder %v514, %v334
    %vm531 = vcmp.eq.s32.totalorder %v515, %v334
    %vm532 = vcmp.eq.s32.totalorder %v516, %v334
    %vm533 = vcmp.eq.s32.totalorder %v517, %v334
    %vm534 = vcmp.eq.s32.totalorder %v518, %v334
    %vm535 = vcmp.eq.s32.totalorder %v519, %v334
    %vm536 = vcmp.eq.s32.totalorder %v520, %v334
    %vm537 = vcmp.eq.s32.totalorder %v521, %v334
    %vm538 = vcmp.eq.s32.totalorder %v522, %v334
    %vm539 = vcmp.eq.s32.totalorder %v523, %v334
    %vm540 = vcmp.eq.s32.totalorder %v524, %v334
    %vm541 = vcmp.eq.s32.totalorder %v525, %v334
    %vm542 = vcmp.eq.s32.totalorder %v526, %v334
    %vm543 = vcmp.lt.s32.totalorder %v317, 40
    %vm544 = vcmp.lt.s32.totalorder %v318, 40
    %vm545 = vcmp.lt.s32.totalorder %v319, 40
    %vm546 = vcmp.lt.s32.totalorder %v320, 40
    %vm547 = vcmp.lt.s32.totalorder %v321, 40
    %vm548 = vcmp.lt.s32.totalorder %v322, 40
    %vm549 = vcmp.lt.s32.totalorder %v323, 40
    %vm550 = vcmp.lt.s32.totalorder %v324, 40
    %vm551 = vcmp.lt.s32.totalorder %v325, 40
    %vm552 = vcmp.lt.s32.totalorder %v326, 40
    %vm553 = vcmp.lt.s32.totalorder %v327, 40
    %vm554 = vcmp.lt.s32.totalorder %v328, 40
    %vm555 = vcmp.lt.s32.totalorder %v329, 40
    %vm556 = vcmp.lt.s32.totalorder %v330, 40
    %vm557 = vcmp.lt.s32.totalorder %v331, 40
    %vm558 = vcmp.lt.s32.totalorder %v332, 40
    %vm559 = vmand %vm527, %vm543
    %vm560 = vmand %vm528, %vm544
    %vm561 = vmand %vm529, %vm545
    %vm562 = vmand %vm530, %vm546
    %vm563 = vmand %vm531, %vm547
    %vm564 = vmand %vm532, %vm548
    %vm565 = vmand %vm533, %vm549
    %vm566 = vmand %vm534, %vm550
    %vm567 = vmand %vm535, %vm551
    %vm568 = vmand %vm536, %vm552
    %vm569 = vmand %vm537, %vm553
    %vm570 = vmand %vm538, %vm554
    %vm571 = vmand %vm539, %vm555
    %vm572 = vmand %vm540, %vm556
    %vm573 = vmand %vm541, %vm557
    %vm574 = vmand %vm542, %vm558
    %v575 = vsel %vm559, -0.5555556, 0.0
    %v576 = vsel %vm560, -0.5555556, 0.0
    %v577 = vsel %vm561, -0.5555556, 0.0
    %v578 = vsel %vm562, -0.5555556, 0.0
    %v579 = vsel %vm563, -0.5555556, 0.0
    %v580 = vsel %vm564, -0.5555556, 0.0
    %v581 = vsel %vm565, -0.5555556, 0.0
    %v582 = vsel %vm566, -0.5555556, 0.0
    %v583 = vsel %vm567, -0.5555556, 0.0
    %v584 = vsel %vm568, -0.5555556, 0.0
    %v585 = vsel %vm569, -0.5555556, 0.0
    %v586 = vsel %vm570, -0.5555556, 0.0
    %v587 = vsel %vm571, -0.5555556, 0.0
    %v588 = vsel %vm572, -0.5555556, 0.0
    %v589 = vsel %vm573, -0.5555556, 0.0
    %v590 = vsel %vm574, -0.5555556, 0.0
    %591 = vmatprep.subr.mxu0 0.0
    %592 = vmatpush1.msra.mxu0 %v575
    %593 = vmatprep.subr.mxu0 0.0
    %594 = vmatpush1.msra.mxu0 %v576
    %595 = vmatprep.subr.mxu0 0.0
    %596 = vmatpush1.msra.mxu0 %v577
    %597 = vmatprep.subr.mxu0 0.0
    %598 = vmatpush1.msra.mxu0 %v578
    %599 = vmatprep.subr.mxu0 0.0
    %600 = vmatpush1.msra.mxu0 %v579
    %601 = vmatprep.subr.mxu0 0.0
    %602 = vmatpush1.msra.mxu0 %v580
    %603 = vmatprep.subr.mxu0 0.0
    %604 = vmatpush1.msra.mxu0 %v581
    %605 = vmatprep.subr.mxu0 0.0
    %606 = vmatpush1.msra.mxu0 %v582
    %607 = vmatprep.subr.mxu0 0.0
    %608 = vmatpush1.msra.mxu0 %v583
    %609 = vmatprep.subr.mxu0 0.0
    %610 = vmatpush1.msra.mxu0 %v584
    %611 = vmatprep.subr.mxu0 0.0
    %612 = vmatpush1.msra.mxu0 %v585
    %613 = vmatprep.subr.mxu0 0.0
    %614 = vmatpush1.msra.mxu0 %v586
    %615 = vmatprep.subr.mxu0 0.0
    %616 = vmatpush1.msra.mxu0 %v587
    %617 = vmatprep.subr.mxu0 0.0
    %618 = vmatpush1.msra.mxu0 %v588
    %619 = vmatprep.subr.mxu0 0.0
    %620 = vmatpush1.msra.mxu0 %v589
    %621 = vmatprep.subr.mxu0 0.0
    %622 = vmatpush1.msra.mxu0 %v590
    %623 = vmatprep.subr.mxu0 0.0
    %624 = vmatpush1.msra.mxu0 0.0
    %625 = vmatprep.subr.mxu0 0.0
    %626 = vmatpush1.msra.mxu0 0.0
    %627 = vmatprep.subr.mxu0 0.0
    %628 = vmatpush1.msra.mxu0 0.0
    %629 = vmatprep.subr.mxu0 0.0
    %630 = vmatpush1.msra.mxu0 0.0
    %631 = vmatprep.subr.mxu0 0.0
    %632 = vmatpush1.msra.mxu0 0.0
    %633 = vmatprep.subr.mxu0 0.0
    %634 = vmatpush1.msra.mxu0 0.0
    %635 = vmatprep.subr.mxu0 0.0
    %636 = vmatpush1.msra.mxu0 0.0
    %637 = vmatprep.subr.mxu0 0.0
    %638 = vmatpush1.msra.mxu0 0.0
    %639 = vmatprep.subr.mxu0 0.0
    %640 = vmatpush1.msra.mxu0 0.0
    %641 = vmatprep.subr.mxu0 0.0
    %642 = vmatpush1.msra.mxu0 0.0
    %643 = vmatprep.subr.mxu0 0.0
    %644 = vmatpush1.msra.mxu0 0.0
    %645 = vmatprep.subr.mxu0 0.0
    %646 = vmatpush1.msra.mxu0 0.0
    %647 = vmatprep.subr.mxu0 0.0
    %648 = vmatpush1.msra.mxu0 0.0
    %649 = vmatprep.subr.mxu0 0.0
    %650 = vmatpush1.msra.mxu0 0.0
    %651 = vmatprep.subr.mxu0 0.0
    %652 = vmatpush1.msra.mxu0 0.0
    %653 = vmatprep.subr.mxu0 0.0
    %654 = vmatpush1.msra.mxu0 0.0
    %655 = vmatprep.mubr.f32.mxu0 0.0
    %656 = vmatmul.mubr.f32.gmra.mrb[0].mxu0 %v315
    %v657 = vpop.f32.mrb[0].mxu0
    %v658 = vadd.f32 0.0, %v657
    %v659 = vpop.f32.mrb[0].mxu0
    %660 = vdwg.mxu0
    %v661 = vmul.f32 %v658, 1.442695
    %v662 = vpow.pop %v661
    %663 = vst [vmem:[#allocation8] sm:$0xff] %v662
    // Predicated region
    $region34: #{tpu_custom_call.1} parent=1 // pred_check
      _
    $region35: #{tpu_custom_call.1} parent=1 // pred_check_branch
      %665 = sbr.rel (0) target = $region37
    $region36: #{tpu_custom_call.1} parent=1 // pred_region
      %s667 = ssub.s32 128, 128
      %668 = vsyncadd [#allocation4], %s667
      %s670 = sshll.u32 [#allocation7], 4
      %s671 = int_to_ptr.vmem [resolvable:$true] %s670
      %673 = dma.vmem_to_hbm [thread:$0]  %s671, 128, %s6, [#allocation4]
    $region37: #{tpu_custom_call.1} parent=1 // pred_fallthru
      _
    // Predicated region
    $region38: #{tpu_custom_call.1} parent=1 // pred_check
      _
    $region39: #{tpu_custom_call.1} parent=1 // pred_check_branch
      %675 = sbr.rel (0) target = $region41
    $region40: #{tpu_custom_call.1} parent=1 // pred_region
      %s677 = ssub.s32 128, 128
      %678 = vsyncadd [#allocation9], %s677
      %s680 = sshll.u32 [#allocation8], 4
      %s681 = int_to_ptr.vmem [resolvable:$true] %s680
      %683 = dma.vmem_to_hbm [thread:$0]  %s681, 128, %s7, [#allocation9]
    $region41: #{tpu_custom_call.1} parent=1 // pred_fallthru
      _
    // Predicated region
    $region42: #{tpu_custom_call.1} parent=1 // pred_check
      _
    $region43: #{tpu_custom_call.1} parent=1 // pred_check_branch
      %685 = sbr.rel (0) target = $region45
    $region44: #{tpu_custom_call.1} parent=1 // pred_region
      %686 = dma.done [#allocation4], 128
    $region45: #{tpu_custom_call.1} parent=1 // pred_fallthru
      _
    // Predicated region
    $region46: #{tpu_custom_call.1} parent=1 // pred_check
      _
    $region47: #{tpu_custom_call.1} parent=1 // pred_check_branch
      %688 = sbr.rel (0) target = $region49
    $region48: #{tpu_custom_call.1} parent=1 // pred_region
      %689 = dma.done [#allocation9], 128
    $region49: #{tpu_custom_call.1} parent=1 // pred_fallthru
      _
    %690 = vsyncpa [#allocation3], 1
    %691 = vsyncpa [#allocation6], 1
    %692 = vsyncpa [#allocation4], 1
    %693 = vsyncpa [#allocation9], 1

</llo_original>
